<compile_context>
chip_gen: v7x
topology: tpu7x:2x2x1
jax: 0.10.0
libtpu: 0.0.40
codegen_flags: <defaults>
</compile_context>

<pallas_src>
import functools

import jax
import jax.numpy as jnp
from jax.experimental import pallas as pl
from jax.experimental.pallas import tpu as pltpu

LANE = 128
SUBLANE = 8


def _round_up(n, m):
    return ((n + m - 1) // m) * m


# --------------------------------------------------------------------------
# Kernel
# --------------------------------------------------------------------------
def encoder_kernel(x_ref, w1_ref, gamma_ref, beta_ref, wh_ref, bh_ref, eps_ref,
                   qm_ref, qv_ref, lat_ref, *, b_true, no_pad):
    # ---- encoder: Linear -> BatchNorm1d (training-mode batch stats) -> ReLU ----
    # Raw matmul (no bias): the Linear bias cancels exactly inside training-mode
    # BatchNorm, so it never enters the kernel.
    h = jnp.dot(x_ref[...], w1_ref[...],
                preferred_element_type=jnp.float32)            # (B_pad, NH_pad) f32

    # Single-pass batch statistics.  Padded batch rows of h are exactly zero
    # (their x rows are zero-padded), so plain sums over all rows divided by the
    # true batch size give unbiased batch stats without any mask.
    inv_b = 1.0 / float(b_true)
    mean = jnp.sum(h, axis=0, keepdims=True) * inv_b
    var = jnp.maximum(jnp.sum(h * h, axis=0, keepdims=True) * inv_b - mean * mean,
                      0.0)

    # Fold gamma * rsqrt(var+eps), beta and mean into one scale + shift.
    scale = gamma_ref[...] * jax.lax.rsqrt(var + 1e-3)
    shift = beta_ref[...] - mean * scale
    q = jnp.maximum(h * scale + shift, 0.0)                    # f32

    # ---- fused heads: [mean | var] in a single MXU pass ----
    heads = jnp.dot(q.astype(jnp.bfloat16), wh_ref[...],
                    preferred_element_type=jnp.float32) + bh_ref[...]
    q_m = heads[:, :no_pad]
    q_v = jnp.exp(heads[:, no_pad:2 * no_pad]) + 1e-4

    # ---- reparameterize_gaussian: mu + std * eps ----
    qm_ref[...] = q_m
    qv_ref[...] = q_v
    lat_ref[...] = q_m + jnp.sqrt(q_v) * eps_ref[...]


# --------------------------------------------------------------------------
# One-time parameter preparation (hoisted out of the per-call path)
# --------------------------------------------------------------------------
def prepare_params(params):
    """Pad / cast / fuse the weights once.  Returns a dict of device arrays."""
    n_input, n_hidden = params["w1"].shape
    n_output = params["wm"].shape[1]

    ni_pad = _round_up(n_input, LANE)
    nh_pad = _round_up(n_hidden, LANE)
    no_pad = _round_up(n_output, LANE)

    f32, bf16 = jnp.float32, jnp.bfloat16

    w1_p = jnp.zeros((ni_pad, nh_pad), bf16).at[:n_input, :n_hidden].set(
        params["w1"].astype(bf16))
    gamma_p = jnp.zeros((1, nh_pad), f32).at[:, :n_hidden].set(params["gamma"])
    beta_p = jnp.zeros((1, nh_pad), f32).at[:, :n_hidden].set(params["beta"])

    # Fused head weight / bias: cols [0:no_pad) = mean head, [no_pad:2*no_pad) = var head.
    wh_p = jnp.zeros((nh_pad, 2 * no_pad), bf16)
    wh_p = wh_p.at[:n_hidden, :n_output].set(params["wm"].astype(bf16))
    wh_p = wh_p.at[:n_hidden, no_pad:no_pad + n_output].set(params["wv"].astype(bf16))
    bh_p = jnp.zeros((1, 2 * no_pad), f32)
    bh_p = bh_p.at[:, :n_output].set(params["bm"])
    bh_p = bh_p.at[:, no_pad:no_pad + n_output].set(params["bv"])

    return {
        "w1": w1_p, "gamma": gamma_p, "beta": beta_p, "wh": wh_p, "bh": bh_p,
        "dims": (n_input, n_hidden, n_output, ni_pad, nh_pad, no_pad),
    }


# --------------------------------------------------------------------------
# Per-call wrapper
# --------------------------------------------------------------------------
def encoder_forward(x, prepped, key):
    """x: [B, n_input] f32.  Returns (q_m, q_v, latent), each [B, n_output] f32."""
    n_input, _, n_output, ni_pad, nh_pad, no_pad = prepped["dims"]
    B = x.shape[0]
    b_pad = _round_up(max(B, SUBLANE), SUBLANE)

    f32, bf16 = jnp.float32, jnp.bfloat16

    # Only x and the reparameterization noise are padded per call.
    x_p = jnp.zeros((b_pad, ni_pad), bf16).at[:B, :n_input].set(x.astype(bf16))
    eps = jax.random.normal(key, (B, n_output), f32)
    eps_p = jnp.zeros((b_pad, no_pad), f32).at[:B, :n_output].set(eps)

    # Resident-footprint-based scoped-VMEM limit (double-buffer + headroom).
    in_bytes = (x_p.size * 2 + prepped["w1"].size * 2 + prepped["wh"].size * 2
                + (prepped["gamma"].size + prepped["beta"].size
                   + prepped["bh"].size + eps_p.size) * 4)
    out_bytes = 3 * b_pad * no_pad * 4
    interm_bytes = 4 * b_pad * nh_pad * 4          # h, q, scaled copies, heads
    vmem_limit = int(min(120 << 20,
                         max(32 << 20, 2 * (in_bytes + out_bytes) + interm_bytes + (4 << 20))))

    vmem = pl.BlockSpec(memory_space=pltpu.MemorySpace.VMEM)
    kernel = functools.partial(encoder_kernel, b_true=B, no_pad=no_pad)

    out_sds = jax.ShapeDtypeStruct((b_pad, no_pad), f32)
    q_m, q_v, latent = pl.pallas_call(
        kernel,
        out_shape=(out_sds, out_sds, out_sds),
        in_specs=[vmem] * 7,
        out_specs=(vmem, vmem, vmem),
        compiler_params=pltpu.CompilerParams(vmem_limit_bytes=vmem_limit),
    )(x_p, prepped["w1"], prepped["gamma"], prepped["beta"],
      prepped["wh"], prepped["bh"], eps_p)

    return (q_m[:B, :n_output], q_v[:B, :n_output], latent[:B, :n_output])


# --------------------------------------------------------------------------
# Synthetic init + reference + self-test
# --------------------------------------------------------------------------
def init_params(key, n_input, n_hidden, n_output):
    """Deterministic synthetic init (shapes match nn.Linear / nn.BatchNorm1d)."""
    ks = jax.random.split(key, 6)
    scale1 = 1.0 / jnp.sqrt(n_input)
    scale2 = 1.0 / jnp.sqrt(n_hidden)
    return {
        "w1": jax.random.uniform(ks[0], (n_input, n_hidden), jnp.float32, -scale1, scale1),
        "b1": jax.random.uniform(ks[1], (1, n_hidden), jnp.float32, -scale1, scale1),
        "gamma": jnp.ones((1, n_hidden), jnp.float32),
        "beta": jnp.zeros((1, n_hidden), jnp.float32),
        "wm": jax.random.uniform(ks[2], (n_hidden, n_output), jnp.float32, -scale2, scale2),
        "bm": jax.random.uniform(ks[3], (1, n_output), jnp.float32, -scale2, scale2),
        "wv": jax.random.uniform(ks[4], (n_hidden, n_output), jnp.float32, -scale2, scale2),
        "bv": jax.random.uniform(ks[5], (1, n_output), jnp.float32, -scale2, scale2),
    }


def reference_forward(x, params, eps):
    """Pure-JAX reference with the same bf16 quantization of MXU operands."""
    bf16 = jnp.bfloat16
    h = jnp.dot(x.astype(bf16), params["w1"].astype(bf16),
                preferred_element_type=jnp.float32) + params["b1"]
    mu = h.mean(0, keepdims=True)
    var = ((h - mu) ** 2).mean(0, keepdims=True)
    q = jnp.maximum(
        (h - mu) * jax.lax.rsqrt(var + 1e-3) * params["gamma"] + params["beta"], 0.0)
    qm = jnp.dot(q.astype(bf16), params["wm"].astype(bf16),
                 preferred_element_type=jnp.float32) + params["bm"]
    qv = jnp.exp(jnp.dot(q.astype(bf16), params["wv"].astype(bf16),
                         preferred_element_type=jnp.float32) + params["bv"]) + 1e-4
    return qm, qv, qm + jnp.sqrt(qv) * eps


if __name__ == "__main__":
    n_input, n_hidden, n_output = 32, 32, 16

    key = jax.random.PRNGKey(0)
    k_params, k_x, k_noise = jax.random.split(key, 3)

    params = init_params(k_params, n_input, n_hidden, n_output)
    prepped = prepare_params(params)

    # Two batch sizes: one sublane-aligned (8) and one that exercises the
    # padded-batch BatchNorm statistics path (5).
    for B, kn in ((8, k_noise), (5, jax.random.fold_in(k_noise, 1))):
        x = jax.random.normal(jax.random.fold_in(k_x, B), (B, n_input), jnp.float32)

        q_m, q_v, latent = encoder_forward(x, prepped, kn)
        jax.block_until_ready((q_m, q_v, latent))

        eps_ref = jax.random.normal(kn, (B, n_output), jnp.float32)
        qm_ref, qv_ref, lat_ref = reference_forward(x, params, eps_ref)

        assert q_m.shape == (B, n_output)
        assert q_v.shape == (B, n_output)
        assert latent.shape == (B, n_output)
        assert jnp.allclose(q_m, qm_ref, atol=1e-2, rtol=1e-2), f"q_m mismatch (B={B})"
        assert jnp.allclose(q_v, qv_ref, atol=1e-2, rtol=1e-2), f"q_v mismatch (B={B})"
        assert jnp.allclose(latent, lat_ref, atol=1e-2, rtol=1e-2), f"latent mismatch (B={B})"
        assert bool(jnp.all(q_v > 0.0))
        assert bool(jnp.all(jnp.isfinite(latent)))

    print("KERNEL_OK")
</pallas_src>

<mosaic_0001>
module attributes {stable_mosaic.version = 11 : i64} {
  func.func @encoder_kernel(%arg0: memref<8x128xbf16, #tpu.memory_space<vmem>>, %arg1: memref<128x128xbf16, #tpu.memory_space<vmem>>, %arg2: memref<1x128xf32, #tpu.memory_space<vmem>>, %arg3: memref<1x128xf32, #tpu.memory_space<vmem>>, %arg4: memref<128x256xbf16, #tpu.memory_space<vmem>>, %arg5: memref<1x256xf32, #tpu.memory_space<vmem>>, %arg6: memref<8x128xf32, #tpu.memory_space<vmem>>, %arg7: memref<8x128xf32, #tpu.memory_space<vmem>>, %arg8: memref<8x128xf32, #tpu.memory_space<vmem>>, %arg9: memref<8x128xf32, #tpu.memory_space<vmem>>) attributes {dimension_semantics = [], scalar_prefetch = 0 : i64, scratch_operands = 0 : i64, tpu.core_type = #tpu.core_type<tc>} {
    %c0 = arith.constant 0 : index
    %c0_0 = arith.constant 0 : index
    %0 = vector.load %arg0[%c0, %c0_0] : memref<8x128xbf16, #tpu.memory_space<vmem>>, vector<8x128xbf16>
    %c0_1 = arith.constant 0 : index
    %c0_2 = arith.constant 0 : index
    %1 = vector.load %arg1[%c0_1, %c0_2] : memref<128x128xbf16, #tpu.memory_space<vmem>>, vector<128x128xbf16>
    %cst = arith.constant dense<0.000000e+00> : vector<8x128xf32>
    %2 = tpu.matmul %0, %1, %cst {dimension_numbers = #tpu.dot_dimension_numbers<[1], [0], [0], [1], [0, 0, 1, 1], [], []>} : vector<8x128xbf16>, vector<128x128xbf16>, vector<8x128xf32> -> vector<8x128xf32>
    %cst_3 = arith.constant dense<0.000000e+00> : vector<128xf32>
    %3 = vector.multi_reduction <add>, %2, %cst_3 [0] : vector<8x128xf32> to vector<128xf32>
    %4 = vector.shape_cast %3 : vector<128xf32> to vector<1x128xf32>
    %cst_4 = arith.constant 1.250000e-01 : f32
    %5 = vector.broadcast %cst_4 : f32 to vector<1x128xf32>
    %6 = arith.mulf %4, %5 : vector<1x128xf32>
    %7 = arith.mulf %2, %2 : vector<8x128xf32>
    %cst_5 = arith.constant dense<0.000000e+00> : vector<128xf32>
    %8 = vector.multi_reduction <add>, %7, %cst_5 [0] : vector<8x128xf32> to vector<128xf32>
    %9 = vector.shape_cast %8 : vector<128xf32> to vector<1x128xf32>
    %cst_6 = arith.constant 1.250000e-01 : f32
    %10 = vector.broadcast %cst_6 : f32 to vector<1x128xf32>
    %11 = arith.mulf %9, %10 : vector<1x128xf32>
    %12 = arith.mulf %6, %6 : vector<1x128xf32>
    %13 = arith.subf %11, %12 : vector<1x128xf32>
    %cst_7 = arith.constant 0.000000e+00 : f32
    %14 = vector.broadcast %cst_7 : f32 to vector<1x128xf32>
    %15 = arith.maximumf %13, %14 : vector<1x128xf32>
    %c0_8 = arith.constant 0 : index
    %c0_9 = arith.constant 0 : index
    %16 = vector.load %arg2[%c0_8, %c0_9] : memref<1x128xf32, #tpu.memory_space<vmem>>, vector<1x128xf32>
    %cst_10 = arith.constant 1.000000e-03 : f32
    %17 = vector.broadcast %cst_10 : f32 to vector<1x128xf32>
    %18 = arith.addf %15, %17 : vector<1x128xf32>
    %19 = math.rsqrt %18 : vector<1x128xf32>
    %20 = arith.mulf %16, %19 : vector<1x128xf32>
    %c0_11 = arith.constant 0 : index
    %c0_12 = arith.constant 0 : index
    %21 = vector.load %arg3[%c0_11, %c0_12] : memref<1x128xf32, #tpu.memory_space<vmem>>, vector<1x128xf32>
    %22 = arith.mulf %6, %20 : vector<1x128xf32>
    %23 = arith.subf %21, %22 : vector<1x128xf32>
    %24 = vector.broadcast %20 : vector<1x128xf32> to vector<8x128xf32>
    %25 = arith.mulf %2, %24 : vector<8x128xf32>
    %26 = vector.broadcast %23 : vector<1x128xf32> to vector<8x128xf32>
    %27 = arith.addf %25, %26 : vector<8x128xf32>
    %cst_13 = arith.constant 0.000000e+00 : f32
    %28 = vector.broadcast %cst_13 : f32 to vector<8x128xf32>
    %29 = arith.maximumf %27, %28 : vector<8x128xf32>
    %30 = arith.truncf %29 : vector<8x128xf32> to vector<8x128xbf16>
    %c0_14 = arith.constant 0 : index
    %c0_15 = arith.constant 0 : index
    %31 = vector.load %arg4[%c0_14, %c0_15] : memref<128x256xbf16, #tpu.memory_space<vmem>>, vector<128x256xbf16>
    %cst_16 = arith.constant dense<0.000000e+00> : vector<8x256xf32>
    %32 = tpu.matmul %30, %31, %cst_16 {dimension_numbers = #tpu.dot_dimension_numbers<[1], [0], [0], [1], [0, 0, 1, 1], [], []>} : vector<8x128xbf16>, vector<128x256xbf16>, vector<8x256xf32> -> vector<8x256xf32>
    %c0_17 = arith.constant 0 : index
    %c0_18 = arith.constant 0 : index
    %33 = vector.load %arg5[%c0_17, %c0_18] : memref<1x256xf32, #tpu.memory_space<vmem>>, vector<1x256xf32>
    %34 = vector.broadcast %33 : vector<1x256xf32> to vector<8x256xf32>
    %35 = arith.addf %32, %34 : vector<8x256xf32>
    %36 = vector.extract_strided_slice %35 {offsets = [0, 0], sizes = [8, 128], strides = [1, 1]} : vector<8x256xf32> to vector<8x128xf32>
    %37 = vector.extract_strided_slice %35 {offsets = [0, 128], sizes = [8, 128], strides = [1, 1]} : vector<8x256xf32> to vector<8x128xf32>
    %38 = math.exp %37 : vector<8x128xf32>
    %cst_19 = arith.constant 9.99999974E-5 : f32
    %39 = vector.broadcast %cst_19 : f32 to vector<8x128xf32>
    %40 = arith.addf %38, %39 : vector<8x128xf32>
    %c0_20 = arith.constant 0 : index
    %c0_21 = arith.constant 0 : index
    %41 = vector.load %arg7[%c0_20, %c0_21] : memref<8x128xf32, #tpu.memory_space<vmem>>, vector<8x128xf32>
    tpu.vector_store %arg7[%c0_20, %c0_21], %36 {strides = array<i32>} : memref<8x128xf32, #tpu.memory_space<vmem>>, vector<8x128xf32>,
    %c0_22 = arith.constant 0 : index
    %c0_23 = arith.constant 0 : index
    %42 = vector.load %arg8[%c0_22, %c0_23] : memref<8x128xf32, #tpu.memory_space<vmem>>, vector<8x128xf32>
    tpu.vector_store %arg8[%c0_22, %c0_23], %40 {strides = array<i32>} : memref<8x128xf32, #tpu.memory_space<vmem>>, vector<8x128xf32>,
    %43 = math.sqrt %40 : vector<8x128xf32>
    %c0_24 = arith.constant 0 : index
    %c0_25 = arith.constant 0 : index
    %44 = vector.load %arg6[%c0_24, %c0_25] : memref<8x128xf32, #tpu.memory_space<vmem>>, vector<8x128xf32>
    %45 = arith.mulf %43, %44 : vector<8x128xf32>
    %46 = arith.addf %36, %45 : vector<8x128xf32>
    %c0_26 = arith.constant 0 : index
    %c0_27 = arith.constant 0 : index
    %47 = vector.load %arg9[%c0_26, %c0_27] : memref<8x128xf32, #tpu.memory_space<vmem>>, vector<8x128xf32>
    tpu.vector_store %arg9[%c0_26, %c0_27], %46 {strides = array<i32>} : memref<8x128xf32, #tpu.memory_space<vmem>>, vector<8x128xf32>,
    return
  }
}

</mosaic_0001>

<llo_original>
// kernel: tpu_custom_call.1
$region0: #{tpu_custom_call.1}
  #allocation0 [shape = 'u32[]', space=smem, size = 0x4, offset = 0x4, fixed_abs, tag = 'smem constant byte address 0x4 - core index']
  #allocation1 [shape = 'u32[144,128]{1,0:T(1,128)}', space=vmem, size = 0x12000, scoped, tag = 'internal scratch']
  %s0 = inlined_call_operand.hbm [shape: bf16[8,128], index: 0, kind: input, shape index: {}]
  %s1 = inlined_call_operand.hbm [shape: bf16[128,128], index: 1, kind: input, shape index: {}]
  %s2 = inlined_call_operand.vmem [shape: f32[1,128], index: 2, kind: input, shape index: {}]
  %s3 = inlined_call_operand.vmem [shape: f32[1,128], index: 3, kind: input, shape index: {}]
  %s4 = inlined_call_operand.hbm [shape: bf16[128,256], index: 4, kind: input, shape index: {}]
  %s5 = inlined_call_operand.vmem [shape: f32[1,256], index: 5, kind: input, shape index: {}]
  %s6 = inlined_call_operand.vmem [shape: f32[8,128], index: 6, kind: input, shape index: {}]
  %s7 = inlined_call_operand.hbm [shape: f32[8,128], index: 7, kind: output, shape index: {0}]
  %s8 = inlined_call_operand.hbm [shape: f32[8,128], index: 8, kind: output, shape index: {1}]
  %s9 = inlined_call_operand.hbm [shape: f32[8,128], index: 9, kind: output, shape index: {2}]
  %10 = xla_tuple %s7, %s8, %s9
  %s11 = sld [smem:[#allocation0]]
  $region66: #{tpu_custom_call.1} parent=0
    _
  %s13 = ssub.s32 1, %s11
  %s14 = scalar_select 0, %s13, %s11
  $region1: #{tpu_custom_call.1} parent=0
    #allocation2 [shape = 'u8[2048]{0}', space=vmem, size = 0x800, scoped, tag = 'input window, operand 0, single buffered']
    #allocation3 [shape = 's32[1]{0}', space=sflag, size = 0x4, scoped, tag = 'scoped memory for tpu_custom_call.1']
    #allocation4 [shape = 's32[1]{0}', space=sflag, size = 0x4, scoped, tag = 'scoped memory for tpu_custom_call.1']
    #allocation5 [shape = 'u8[32768]{0}', space=vmem, size = 0x8000, scoped, tag = 'input window, operand 1, single buffered']
    #allocation6 [shape = 's32[1]{0}', space=sflag, size = 0x4, scoped, tag = 'scoped memory for tpu_custom_call.1']
    #allocation7 [shape = 'u8[65536]{0}', space=vmem, size = 0x10000, scoped, tag = 'input window, operand 4, single buffered']
    #allocation8 [shape = 'u8[4096]{0}', space=vmem, size = 0x1000, scoped, tag = 'output window, operand 0, single buffered']
    #allocation9 [shape = 'u8[4096]{0}', space=vmem, size = 0x1000, scoped, tag = 'output window, operand 1, single buffered']
    #allocation10 [shape = 's32[1]{0}', space=sflag, size = 0x4, scoped, tag = 'scoped memory for tpu_custom_call.1']
    #allocation11 [shape = 'u8[4096]{0}', space=vmem, size = 0x1000, scoped, tag = 'output window, operand 2, single buffered']
    %15 = vsyncpa [#allocation3], 0
    %16 = vsyncpa [#allocation6], 0
    %17 = vsyncpa [#allocation4], 0
    %18 = vsyncpa [#allocation10], 0
    // Predicated region
    $region2: #{tpu_custom_call.1} parent=1 // pred_check
      _
    $region3: #{tpu_custom_call.1} parent=1 // pred_check_branch
      %20 = sbr.rel (0) target = $region5
    $region4: #{tpu_custom_call.1} parent=1 // pred_region
      %s22 = ssub.s32 64, 64
      %23 = vsyncadd [#allocation3], %s22
      %s25 = sshll.u32 [#allocation2], 4
      %s26 = int_to_ptr.vmem [resolvable:$true] %s25
      %28 = dma.hbm_to_vmem [thread:$0]  %s0, 64, %s26, [#allocation3]
    $region5: #{tpu_custom_call.1} parent=1 // pred_fallthru
      _
    // Predicated region
    $region6: #{tpu_custom_call.1} parent=1 // pred_check
      _
    $region7: #{tpu_custom_call.1} parent=1 // pred_check_branch
      %30 = sbr.rel (0) target = $region9
    $region8: #{tpu_custom_call.1} parent=1 // pred_region
      %s32 = ssub.s32 1024, 1024
      %33 = vsyncadd [#allocation6], %s32
      %s34 = sshll.u32 [#allocation5], 4
      %s35 = int_to_ptr.vmem [resolvable:$true] %s34
      %40 = dma.hbm_to_vmem [thread:$0]  %s1, 1024, %s35, [#allocation6], 64, 64, 4
    $region9: #{tpu_custom_call.1} parent=1 // pred_fallthru
      _
    // Predicated region
    $region10: #{tpu_custom_call.1} parent=1 // pred_check
      _
    $region11: #{tpu_custom_call.1} parent=1 // pred_check_branch
      %42 = sbr.rel (0) target = $region13
    $region12: #{tpu_custom_call.1} parent=1 // pred_region
      _
    $region13: #{tpu_custom_call.1} parent=1 // pred_fallthru
      _
    // Predicated region
    $region14: #{tpu_custom_call.1} parent=1 // pred_check
      _
    $region15: #{tpu_custom_call.1} parent=1 // pred_check_branch
      %44 = sbr.rel (0) target = $region17
    $region16: #{tpu_custom_call.1} parent=1 // pred_region
      _
    $region17: #{tpu_custom_call.1} parent=1 // pred_fallthru
      _
    // Predicated region
    $region18: #{tpu_custom_call.1} parent=1 // pred_check
      _
    $region19: #{tpu_custom_call.1} parent=1 // pred_check_branch
      %46 = sbr.rel (0) target = $region21
    $region20: #{tpu_custom_call.1} parent=1 // pred_region
      %s48 = ssub.s32 2048, 2048
      %49 = vsyncadd [#allocation6], %s48
      %s50 = sshll.u32 [#allocation7], 4
      %s51 = int_to_ptr.vmem [resolvable:$true] %s50
      %56 = dma.hbm_to_vmem [thread:$0]  %s4, 2048, %s51, [#allocation6], 128, 128, 8
    $region21: #{tpu_custom_call.1} parent=1 // pred_fallthru
      _
    // Predicated region
    $region22: #{tpu_custom_call.1} parent=1 // pred_check
      _
    $region23: #{tpu_custom_call.1} parent=1 // pred_check_branch
      %58 = sbr.rel (0) target = $region25
    $region24: #{tpu_custom_call.1} parent=1 // pred_region
      _
    $region25: #{tpu_custom_call.1} parent=1 // pred_fallthru
      _
    // Predicated region
    $region26: #{tpu_custom_call.1} parent=1 // pred_check
      _
    $region27: #{tpu_custom_call.1} parent=1 // pred_check_branch
      %60 = sbr.rel (0) target = $region29
    $region28: #{tpu_custom_call.1} parent=1 // pred_region
      _
    $region29: #{tpu_custom_call.1} parent=1 // pred_fallthru
      _
    // Predicated region
    $region30: #{tpu_custom_call.1} parent=1 // pred_check
      _
    $region31: #{tpu_custom_call.1} parent=1 // pred_check_branch
      %62 = sbr.rel (0) target = $region33
    $region32: #{tpu_custom_call.1} parent=1 // pred_region
      %63 = dma.done [#allocation3], 64
    $region33: #{tpu_custom_call.1} parent=1 // pred_fallthru
      _
    // Predicated region
    $region34: #{tpu_custom_call.1} parent=1 // pred_check
      _
    $region35: #{tpu_custom_call.1} parent=1 // pred_check_branch
      %65 = sbr.rel (0) target = $region37
    $region36: #{tpu_custom_call.1} parent=1 // pred_region
      %66 = dma.done [#allocation6], 1024
    $region37: #{tpu_custom_call.1} parent=1 // pred_fallthru
      _
    // Predicated region
    $region38: #{tpu_custom_call.1} parent=1 // pred_check
      _
    $region39: #{tpu_custom_call.1} parent=1 // pred_check_branch
      %68 = sbr.rel (0) target = $region41
    $region40: #{tpu_custom_call.1} parent=1 // pred_region
      %69 = dma.done [#allocation6], 2048
    $region41: #{tpu_custom_call.1} parent=1 // pred_fallthru
      _
    %v71 = vld [vmem:[#allocation2] sm:$0xf]
    %v72 = vld [vmem:[#allocation5] sm:$0xf]
    %v73 = vld [vmem:[#allocation5 + $0x4] sm:$0xf]
    %v74 = vld [vmem:[#allocation5 + $0x8] sm:$0xf]
    %v75 = vld [vmem:[#allocation5 + $0xc] sm:$0xf]
    %v76 = vld [vmem:[#allocation5 + $0x10] sm:$0xf]
    %v77 = vld [vmem:[#allocation5 + $0x14] sm:$0xf]
    %v78 = vld [vmem:[#allocation5 + $0x18] sm:$0xf]
    %v79 = vld [vmem:[#allocation5 + $0x1c] sm:$0xf]
    %v80 = vld [vmem:[#allocation5 + $0x20] sm:$0xf]
    %v81 = vld [vmem:[#allocation5 + $0x24] sm:$0xf]
    %v82 = vld [vmem:[#allocation5 + $0x28] sm:$0xf]
    %v83 = vld [vmem:[#allocation5 + $0x2c] sm:$0xf]
    %v84 = vld [vmem:[#allocation5 + $0x30] sm:$0xf]
    %v85 = vld [vmem:[#allocation5 + $0x34] sm:$0xf]
    %v86 = vld [vmem:[#allocation5 + $0x38] sm:$0xf]
    %v87 = vld [vmem:[#allocation5 + $0x3c] sm:$0xf]
    %v104 = vunpack.c.l.b16 %v72
    %v105 = vunpack.c.l.b16 %v73
    %v106 = vunpack.c.l.b16 %v74
    %v107 = vunpack.c.l.b16 %v75
    %v108 = vunpack.c.l.b16 %v76
    %v109 = vunpack.c.l.b16 %v77
    %v110 = vunpack.c.l.b16 %v78
    %v111 = vunpack.c.l.b16 %v79
    %v112 = vunpack.c.l.b16 %v80
    %v113 = vunpack.c.l.b16 %v81
    %v114 = vunpack.c.l.b16 %v82
    %v115 = vunpack.c.l.b16 %v83
    %v116 = vunpack.c.l.b16 %v84
    %v117 = vunpack.c.l.b16 %v85
    %v118 = vunpack.c.l.b16 %v86
    %v119 = vunpack.c.l.b16 %v87
    %v120 = vpack.c.b16 %v105, %v104
    %v121 = vpack.c.b16 %v107, %v106
    %v122 = vpack.c.b16 %v109, %v108
    %v123 = vpack.c.b16 %v111, %v110
    %v124 = vpack.c.b16 %v113, %v112
    %v125 = vpack.c.b16 %v115, %v114
    %v126 = vpack.c.b16 %v117, %v116
    %v127 = vpack.c.b16 %v119, %v118
    %136 = vmatprep.subr.bf16.mxu0 0
    %137 = vmatpush1.bf16.msra.mxu0 %v120
    %138 = vmatprep.subr.bf16.mxu0 0
    %139 = vmatpush1.bf16.msra.mxu0 %v121
    %140 = vmatprep.subr.bf16.mxu0 0
    %141 = vmatpush1.bf16.msra.mxu0 %v122
    %142 = vmatprep.subr.bf16.mxu0 0
    %143 = vmatpush1.bf16.msra.mxu0 %v123
    %144 = vmatprep.subr.bf16.mxu0 0
    %145 = vmatpush1.bf16.msra.mxu0 %v124
    %146 = vmatprep.subr.bf16.mxu0 0
    %147 = vmatpush1.bf16.msra.mxu0 %v125
    %148 = vmatprep.subr.bf16.mxu0 0
    %149 = vmatpush1.bf16.msra.mxu0 %v126
    %150 = vmatprep.subr.bf16.mxu0 0
    %151 = vmatpush1.bf16.msra.mxu0 %v127
    %152 = vmatprep.subr.bf16.mxu0 0
    %153 = vmatpush1.bf16.msra.mxu0 0
    %154 = vmatprep.subr.bf16.mxu0 0
    %155 = vmatpush1.bf16.msra.mxu0 0
    %156 = vmatprep.subr.bf16.mxu0 0
    %157 = vmatpush1.bf16.msra.mxu0 0
    %158 = vmatprep.subr.bf16.mxu0 0
    %159 = vmatpush1.bf16.msra.mxu0 0
    %160 = vmatprep.subr.bf16.mxu0 0
    %161 = vmatpush1.bf16.msra.mxu0 0
    %162 = vmatprep.subr.bf16.mxu0 0
    %163 = vmatpush1.bf16.msra.mxu0 0
    %164 = vmatprep.subr.bf16.mxu0 0
    %165 = vmatpush1.bf16.msra.mxu0 0
    %166 = vmatprep.subr.bf16.mxu0 0
    %167 = vmatpush1.bf16.msra.mxu0 0
    %168 = vmatprep.mubr.bf16.mxu0 0
    %169 = vmatmul.mubr.bf16.gmra.mrb[0].mxu0 %v71
    %v170 = vpop.f32.mrb[0].mxu0
    %v171 = vadd.f32 0.0, %v170
    %v172 = vpop.f32.mrb[0].mxu0
    %v173 = vpop.f32.mrb[0].mxu0
    %v174 = vpop.f32.mrb[0].mxu0
    %175 = vdwg.mxu0
    %v176 = vrot.slane %v171, 4
    %v177 = vadd.f32 %v171, %v176
    %v178 = vrot.slane %v177, 2
    %v179 = vadd.f32 %v177, %v178
    %v180 = vrot.slane %v179, 1
    %v181 = vadd.f32 %v179, %v180
    %v182 = vmul.f32 %v181, 0.125
    %v183 = vmul.f32 %v171, %v171
    %v184 = vrot.slane %v183, 4
    %v185 = vadd.f32 %v183, %v184
    %v186 = vrot.slane %v185, 2
    %v187 = vadd.f32 %v185, %v186
    %v188 = vrot.slane %v187, 1
    %v189 = vadd.f32 %v187, %v188
    %v190 = vmul.f32 %v189, 0.125
    %v191 = vmul.f32 %v182, %v182
    %v192 = vsub.f32 %v190, %v191
    %v193 = vmax.f32 %v192, 0.0
    %v194 = vld [vmem:[%s2] sm:$0x1]
    %v195 = vadd.f32 %v193, 0.001
    %v196 = vrsqrt.pop %v195
    %v197 = vmul.f32 %v194, %v196
    %v198 = vld [vmem:[%s3] sm:$0x1]
    %v199 = vmul.f32 %v182, %v197
    %v200 = vsub.f32 %v198, %v199
    %v202 = vlaneseq
    %v203 = vshrl.u32 %v202, 7
    %v204 = vsub.s32 0, %v203
    %v205 = vrot.slane %v197, %v204
    %v207 = vmul.f32 %v171, %v205
    %v209 = vlaneseq
    %v210 = vshrl.u32 %v209, 7
    %v211 = vsub.s32 0, %v210
    %v212 = vrot.slane %v200, %v211
    %v214 = vadd.f32 %v207, %v212
    %v215 = vmax.f32 %v214, 0.0
    %v216 = vpack.c.bf16 %v215, %v215
    %v217 = vld [vmem:[#allocation7] sm:$0xff]
    %v218 = vld [vmem:[#allocation7 + $0x8] sm:$0xff]
    %v219 = vld [vmem:[#allocation7 + $0x10] sm:$0xff]
    %v220 = vld [vmem:[#allocation7 + $0x18] sm:$0xff]
    %v221 = vld [vmem:[#allocation7 + $0x20] sm:$0xff]
    %v222 = vld [vmem:[#allocation7 + $0x28] sm:$0xff]
    %v223 = vld [vmem:[#allocation7 + $0x30] sm:$0xff]
    %v224 = vld [vmem:[#allocation7 + $0x38] sm:$0xff]
    %v225 = vld [vmem:[#allocation7 + $0x40] sm:$0xff]
    %v226 = vld [vmem:[#allocation7 + $0x48] sm:$0xff]
    %v227 = vld [vmem:[#allocation7 + $0x50] sm:$0xff]
    %v228 = vld [vmem:[#allocation7 + $0x58] sm:$0xff]
    %v229 = vld [vmem:[#allocation7 + $0x60] sm:$0xff]
    %v230 = vld [vmem:[#allocation7 + $0x68] sm:$0xff]
    %v231 = vld [vmem:[#allocation7 + $0x70] sm:$0xff]
    %v232 = vld [vmem:[#allocation7 + $0x78] sm:$0xff]
    %v233 = vld [vmem:[%s5] sm:$0x3]
    %v235 = vlaneseq
    %v236 = vshrl.u32 %v235, 7
    %v237 = vsub.s32 0, %v236
    %v238 = vrot.slane %v233, %v237
    %v239 = vlaneseq
    %v240 = vshrl.u32 %v239, 7
    %v241 = vsub.s32 1, %v240
    %v242 = vrot.slane %v233, %v241
    %v261 = vunpack.c.l.b16 %v217
    %v262 = vunpack.c.h.b16 %v217
    %v263 = vunpack.c.l.b16 %v218
    %v264 = vunpack.c.h.b16 %v218
    %v265 = vunpack.c.l.b16 %v219
    %v266 = vunpack.c.h.b16 %v219
    %v267 = vunpack.c.l.b16 %v220
    %v268 = vunpack.c.h.b16 %v220
    %v269 = vunpack.c.l.b16 %v221
    %v270 = vunpack.c.h.b16 %v221
    %v271 = vunpack.c.l.b16 %v222
    %v272 = vunpack.c.h.b16 %v222
    %v273 = vunpack.c.l.b16 %v223
    %v274 = vunpack.c.h.b16 %v223
    %v275 = vunpack.c.l.b16 %v224
    %v276 = vunpack.c.h.b16 %v224
    %v277 = vunpack.c.l.b16 %v225
    %v278 = vunpack.c.h.b16 %v225
    %v279 = vunpack.c.l.b16 %v226
    %v280 = vunpack.c.h.b16 %v226
    %v281 = vunpack.c.l.b16 %v227
    %v282 = vunpack.c.h.b16 %v227
    %v283 = vunpack.c.l.b16 %v228
    %v284 = vunpack.c.h.b16 %v228
    %v285 = vunpack.c.l.b16 %v229
    %v286 = vunpack.c.h.b16 %v229
    %v287 = vunpack.c.l.b16 %v230
    %v288 = vunpack.c.h.b16 %v230
    %v289 = vunpack.c.l.b16 %v231
    %v290 = vunpack.c.h.b16 %v231
    %v291 = vunpack.c.l.b16 %v232
    %v292 = vunpack.c.h.b16 %v232
    %v293 = vpack.c.b16 %v263, %v261
    %v294 = vpack.c.b16 %v264, %v262
    %v295 = vpack.c.b16 %v267, %v265
    %v296 = vpack.c.b16 %v268, %v266
    %v297 = vpack.c.b16 %v271, %v269
    %v298 = vpack.c.b16 %v272, %v270
    %v299 = vpack.c.b16 %v275, %v273
    %v300 = vpack.c.b16 %v276, %v274
    %v301 = vpack.c.b16 %v279, %v277
    %v302 = vpack.c.b16 %v280, %v278
    %v303 = vpack.c.b16 %v283, %v281
    %v304 = vpack.c.b16 %v284, %v282
    %v305 = vpack.c.b16 %v287, %v285
    %v306 = vpack.c.b16 %v288, %v286
    %v307 = vpack.c.b16 %v291, %v289
    %v308 = vpack.c.b16 %v292, %v290
    %325 = vmatprep.subr.bf16.mxu0 %v294
    %326 = vmatpush1.bf16.msra.mxu0 %v293
    %327 = vmatprep.subr.bf16.mxu0 %v296
    %328 = vmatpush1.bf16.msra.mxu0 %v295
    %329 = vmatprep.subr.bf16.mxu0 %v298
    %330 = vmatpush1.bf16.msra.mxu0 %v297
    %331 = vmatprep.subr.bf16.mxu0 %v300
    %332 = vmatpush1.bf16.msra.mxu0 %v299
    %333 = vmatprep.subr.bf16.mxu0 %v302
    %334 = vmatpush1.bf16.msra.mxu0 %v301
    %335 = vmatprep.subr.bf16.mxu0 %v304
    %336 = vmatpush1.bf16.msra.mxu0 %v303
    %337 = vmatprep.subr.bf16.mxu0 %v306
    %338 = vmatpush1.bf16.msra.mxu0 %v305
    %339 = vmatprep.subr.bf16.mxu0 %v308
    %340 = vmatpush1.bf16.msra.mxu0 %v307
    %341 = vmatprep.subr.bf16.mxu0 0
    %342 = vmatpush1.bf16.msra.mxu0 0
    %343 = vmatprep.subr.bf16.mxu0 0
    %344 = vmatpush1.bf16.msra.mxu0 0
    %345 = vmatprep.subr.bf16.mxu0 0
    %346 = vmatpush1.bf16.msra.mxu0 0
    %347 = vmatprep.subr.bf16.mxu0 0
    %348 = vmatpush1.bf16.msra.mxu0 0
    %349 = vmatprep.subr.bf16.mxu0 0
    %350 = vmatpush1.bf16.msra.mxu0 0
    %351 = vmatprep.subr.bf16.mxu0 0
    %352 = vmatpush1.bf16.msra.mxu0 0
    %353 = vmatprep.subr.bf16.mxu0 0
    %354 = vmatpush1.bf16.msra.mxu0 0
    %355 = vmatprep.subr.bf16.mxu0 0
    %356 = vmatpush1.bf16.msra.mxu0 0
    %357 = vmatprep.mubr.bf16.mxu0 0
    %358 = vmatmul.mubr.bf16.gmra.mrb[0].mxu0 %v216
    %v359 = vpop.f32.mrb[0].mxu0
    %v360 = vadd.f32 %v238, %v359
    %v361 = vpop.f32.mrb[0].mxu0
    %v362 = vadd.f32 %v242, %v361
    %v363 = vpop.f32.mrb[0].mxu0
    %v364 = vpop.f32.mrb[0].mxu0
    %365 = vdwg.mxu0
    %v366 = vmul.f32 %v362, 1.442695
    %v367 = vpow.pop %v366
    %v368 = vadd.f32 %v367, 0.0001
    %369 = vst [vmem:[#allocation8] sm:$0xff] %v360
    %370 = vst [vmem:[#allocation9] sm:$0xff] %v368
    %v371 = vrsqrt.pop %v368
    %v372 = vmul.f32 %v368, %v371
    %vm373 = vcmp.eq.f32.partialorder %v368, inf
    %v374 = vsel %vm373, %v368, %v372
    %vm375 = vcmp.eq.f32.partialorder %v368, 0.0
    %v376 = vand.u32 %v368, 2147483648
    %v377 = vsel %vm375, %v376, %v374
    %v378 = vld [vmem:[%s6] sm:$0xff]
    %v379 = vmul.f32 %v377, %v378
    %v380 = vadd.f32 %v360, %v379
    %381 = vst [vmem:[#allocation11] sm:$0xff] %v380
    // Predicated region
    $region42: #{tpu_custom_call.1} parent=1 // pred_check
      _
    $region43: #{tpu_custom_call.1} parent=1 // pred_check_branch
      %383 = sbr.rel (0) target = $region45
    $region44: #{tpu_custom_call.1} parent=1 // pred_region
      %s385 = ssub.s32 128, 128
      %386 = vsyncadd [#allocation4], %s385
      %s388 = sshll.u32 [#allocation8], 4
      %s389 = int_to_ptr.vmem [resolvable:$true] %s388
      %391 = dma.vmem_to_hbm [thread:$0]  %s389, 128, %s7, [#allocation4]
    $region45: #{tpu_custom_call.1} parent=1 // pred_fallthru
      _
    // Predicated region
    $region46: #{tpu_custom_call.1} parent=1 // pred_check
      _
    $region47: #{tpu_custom_call.1} parent=1 // pred_check_branch
      %393 = sbr.rel (0) target = $region49
    $region48: #{tpu_custom_call.1} parent=1 // pred_region
      %s395 = ssub.s32 128, 128
      %396 = vsyncadd [#allocation10], %s395
      %s398 = sshll.u32 [#allocation9], 4
      %s399 = int_to_ptr.vmem [resolvable:$true] %s398
      %401 = dma.vmem_to_hbm [thread:$0]  %s399, 128, %s8, [#allocation10]
    $region49: #{tpu_custom_call.1} parent=1 // pred_fallthru
      _
    // Predicated region
    $region50: #{tpu_custom_call.1} parent=1 // pred_check
      _
    $region51: #{tpu_custom_call.1} parent=1 // pred_check_branch
      %403 = sbr.rel (0) target = $region53
    $region52: #{tpu_custom_call.1} parent=1 // pred_region
      %s405 = ssub.s32 128, 128
      %406 = vsyncadd [#allocation10], %s405
      %s408 = sshll.u32 [#allocation11], 4
      %s409 = int_to_ptr.vmem [resolvable:$true] %s408
      %411 = dma.vmem_to_hbm [thread:$0]  %s409, 128, %s9, [#allocation10]
    $region53: #{tpu_custom_call.1} parent=1 // pred_fallthru
      _
    // Predicated region
    $region54: #{tpu_custom_call.1} parent=1 // pred_check
      _
    $region55: #{tpu_custom_call.1} parent=1 // pred_check_branch
      %413 = sbr.rel (0) target = $region57
    $region56: #{tpu_custom_call.1} parent=1 // pred_region
      %414 = dma.done [#allocation4], 128
    $region57: #{tpu_custom_call.1} parent=1 // pred_fallthru
      _
    // Predicated region
    $region58: #{tpu_custom_call.1} parent=1 // pred_check
      _
    $region59: #{tpu_custom_call.1} parent=1 // pred_check_branch
      %416 = sbr.rel (0) target = $region61
    $region60: #{tpu_custom_call.1} parent=1 // pred_region
      %417 = dma.done [#allocation10], 128
    $region61: #{tpu_custom_call.1} parent=1 // pred_fallthru
      _
    // Predicated region
    $region62: #{tpu_custom_call.1} parent=1 // pred_check
      _
    $region63: #{tpu_custom_call.1} parent=1 // pred_check_branch
      %419 = sbr.rel (0) target = $region65
    $region64: #{tpu_custom_call.1} parent=1 // pred_region
      %420 = dma.done [#allocation10], 128
    $region65: #{tpu_custom_call.1} parent=1 // pred_fallthru
      _
    %421 = vsyncpa [#allocation3], 1
    %422 = vsyncpa [#allocation6], 1
    %423 = vsyncpa [#allocation4], 1
    %424 = vsyncpa [#allocation10], 1

</llo_original>
